<compile_context>
chip_gen: v7x
topology: tpu7x:2x2x1
jax: 0.10.0
libtpu: 0.0.40
codegen_flags: <defaults>
</compile_context>

<pallas_src>
import functools

import jax
import jax.numpy as jnp
from jax.experimental import pallas as pl
from jax.experimental.pallas import tpu as pltpu


# ---------------------------------------------------------------------------
# One-time probe: which rotate convention does pltpu.roll use on this backend?
# (np.roll convention:  roll(x, s)[i] == x[i - s])
# Run once per process, outside any jit, so conv3 tap shifts are always correct.
# ---------------------------------------------------------------------------
@functools.lru_cache(maxsize=None)
def _pltpu_roll_is_np_convention():
    def k(x_ref, o_ref):
        o_ref[...] = pltpu.roll(x_ref[...], shift=1, axis=1)

    x = jnp.arange(8 * 128, dtype=jnp.float32).reshape(8, 128)
    y = pl.pallas_call(k, out_shape=jax.ShapeDtypeStruct((8, 128), jnp.float32))(x)
    return bool(jax.device_get(y)[0, 1] == 0.0)


# ---------------------------------------------------------------------------
# Fused kernel: [pre(1x1, on host-upsampled earlier) + concat] + c1..c6
# All refs are 2-D: activations (C, N) with N = b_tile*H*W, weights (Cout, Cin')
# ---------------------------------------------------------------------------
def _fused_anchors_kernel(*refs, has_pre, H, W, compute_dtype, roll_np):
    HW = H * W
    if has_pre:
        (x_ref, e_ref, wp_ref, bp_ref, w1p_ref, w1x_ref, b1_ref,
         w2_ref, b2_ref, w3_ref, b3_ref, w4_ref, b4_ref,
         w5_ref, b5_ref, w6_ref, b6_ref, xp_ref, x6_ref) = refs
    else:
        (x_ref, w1_ref, b1_ref, w2_ref, b2_ref, w3_ref, b3_ref,
         w4_ref, b4_ref, w5_ref, b5_ref, w6_ref, b6_ref,
         xp_ref, x6_ref) = refs

    N = x_ref.shape[1]                      # = b_tile * H * W

    def _c(v):
        return v if v.dtype == compute_dtype else v.astype(compute_dtype)

    def mm(a, b):
        # MXU matmul; bf16 operands on the fast path, f32 accumulation.
        return jnp.dot(_c(a), _c(b), preferred_element_type=jnp.float32)

    def leaky(y):
        return jnp.where(y > 0, y, 0.1 * y)        # LeakyReLU(0.1), f32 epilogue

    # Per-image edge masks.  The lane axis stacks b_tile images of H*W pixels, so
    # dy/dx taps must not leak across row / column / image boundaries.
    p = jax.lax.broadcasted_iota(jnp.int32, (1, N), 1)
    w_pos = p % W
    h_pos = (p % HW) // W
    row_mask = {-1: h_pos >= 1, 0: None, 1: h_pos <= H - 2}
    col_mask = {-1: w_pos >= 1, 0: None, 1: w_pos <= W - 2}
    tap_mask = {}
    for dy in (-1, 0, 1):
        for dx in (-1, 0, 1):
            mr, mc = row_mask[dy], col_mask[dx]
            if mr is None:
                tap_mask[(dy, dx)] = mc
            elif mc is None:
                tap_mask[(dy, dx)] = mr
            else:
                tap_mask[(dy, dx)] = mr & mc

    def shift_tap(a, s):
        # out[:, q] = a[:, (q + s) mod N]  (the circular wrap is masked by caller)
        if s == 0:
            return a
        sh = (-s) % N if roll_np else s % N
        return pltpu.roll(a, shift=sh, axis=1)

    def conv3(a, w_ref, b_ref):
        # a: (Cin, N).  Build the 9 shifted taps with XLU rolls + edge masks and
        # contract them in a single (Cout, 9*Cin) @ (9*Cin, N) matmul.
        cols = []
        for dy in (-1, 0, 1):
            for dx in (-1, 0, 1):
                tap = shift_tap(a, dy * W + dx)
                m = tap_mask[(dy, dx)]
                if m is not None:
                    tap = jnp.where(m, tap, 0.0)
                cols.append(tap)
        xcol = jnp.concatenate(cols, axis=0)        # (9*Cin, N)
        return leaky(mm(w_ref[...], xcol) + b_ref[...])

    x = x_ref[...]                                  # (Cx, N), f32
    if has_pre:
        # `earlier` was nearest-x2 upsampled on the host (exact: the 1x1 conv + BN +
        # LeakyReLU are pointwise, so they commute with the replication).  The concat
        # torch.cat([pre(earlier), x], 1) is folded into c1 via the split weights.
        e = leaky(mm(wp_ref[...], e_ref[...]) + bp_ref[...])           # (Cpre, N)
        y = leaky(mm(w1p_ref[...], e) + mm(w1x_ref[...], x) + b1_ref[...])
    else:
        y = leaky(mm(w1_ref[...], x) + b1_ref[...])                    # c1 (1x1)

    y = conv3(y, w2_ref, b2_ref)                                       # c2 (3x3)
    y = leaky(mm(w3_ref[...], y) + b3_ref[...])                        # c3 (1x1)
    y = conv3(y, w4_ref, b4_ref)                                       # c4 (3x3)
    x_p = leaky(mm(w5_ref[...], y) + b5_ref[...])                      # c5 (1x1)
    x6 = conv3(x_p, w6_ref, b6_ref)                                    # c6 (3x3)

    xp_ref[...] = x_p.astype(xp_ref.dtype)
    x6_ref[...] = x6.astype(x6_ref.dtype)


# ---------------------------------------------------------------------------
# Parameter prep: fold BatchNorm (eval) into conv weights, flatten 3x3 taps
# ---------------------------------------------------------------------------
def _prep_1x1(block):
    w, scale, bias = block['w'], block['scale'], block['bias']
    assert w.shape[0] == 1 and w.shape[1] == 1
    wk = (w[0, 0] * scale[None, :]).T                      # (Cout, Cin)
    return wk, bias[:, None]                               # bias (Cout, 1), stays f32


def _prep_3x3(block):
    w, scale, bias = block['w'], block['scale'], block['bias']
    assert w.shape[0] == 3 and w.shape[1] == 3, "only 3x3 'same' convs supported"
    cout = w.shape[-1]
    ws = w * scale[None, None, None, :]                    # fold BN scale
    wk = jnp.transpose(ws, (3, 0, 1, 2)).reshape(cout, -1) # (Cout, 9*Cin), tap-major
    return wk, bias[:, None]


def _fold_bn(gamma, beta, mean, var, eps=1e-5):
    scale = gamma / jnp.sqrt(var + eps)
    bias = beta - mean * scale
    return scale, bias


def _init_block(key, K, cin, cout):
    kw, kg, kb, km, kv = jax.random.split(key, 5)
    w = jax.random.normal(kw, (K, K, cin, cout), jnp.float32) * 0.1     # HWIO
    gamma = jax.random.uniform(kg, (cout,), jnp.float32, 0.8, 1.2)
    beta = jax.random.normal(kb, (cout,), jnp.float32) * 0.1
    mean = jax.random.normal(km, (cout,), jnp.float32) * 0.1
    var = jax.random.uniform(kv, (cout,), jnp.float32, 0.5, 1.5)
    scale, bias = _fold_bn(gamma, beta, mean, var)
    return dict(w=w, scale=scale, bias=bias)


def init_anchors_conv_params(key, in_channels, out_channels, pre=False):
    keys = jax.random.split(key, 7)
    p = {}
    if pre:
        p['pre'] = _init_block(keys[0], 1, 2 * in_channels // 3, in_channels // 3)
    p['c1'] = _init_block(keys[1], 1, in_channels, out_channels // 2)
    p['c2'] = _init_block(keys[2], 3, out_channels // 2, out_channels)
    p['c3'] = _init_block(keys[3], 1, out_channels, out_channels // 2)
    p['c4'] = _init_block(keys[4], 3, out_channels // 2, out_channels)
    p['c5'] = _init_block(keys[5], 1, out_channels, out_channels // 2)
    p['c6'] = _init_block(keys[6], 3, out_channels // 2, out_channels)
    return p


def _pick_b_tile(B, requested=None):
    if requested is not None:
        assert B % requested == 0, "b_tile must divide the batch size"
        return requested
    # Largest divisor of B up to 8, keeping >= 2 grid steps so v7x's two
    # TensorCores both get work (single-TC v5e/v6e don't care).
    best = 1
    for cand in range(1, min(B, 8) + 1):
        if B % cand == 0 and (B // cand >= 2 or B == 1):
            best = cand
    return best


# ---------------------------------------------------------------------------
# AnchorsConv.forward — single fused pallas_call, NCHW in / NCHW out
# ---------------------------------------------------------------------------
def anchors_conv_forward(params, x_nchw, earlier_nchw=None, *,
                         compute_dtype=jnp.bfloat16, b_tile=None):
    B, Cx, H, W = x_nchw.shape
    HW = H * W
    has_pre = 'pre' in params
    cd = compute_dtype

    w1, b1 = _prep_1x1(params['c1'])
    w2, b2 = _prep_3x3(params['c2'])
    w3, b3 = _prep_1x1(params['c3'])
    w4, b4 = _prep_3x3(params['c4'])
    w5, b5 = _prep_1x1(params['c5'])
    w6, b6 = _prep_3x3(params['c6'])
    c_half, c_out = w1.shape[0], w2.shape[0]

    bt = _pick_b_tile(B, b_tile)
    n = bt * HW
    num_steps = B // bt

    # Layout plumbing: channel-major, (batch, pixel)-minor -> lane axis carries b*HW.
    x2d = jnp.transpose(x_nchw.reshape(B, Cx, HW), (1, 0, 2)).reshape(Cx, B * HW)

    per_step, per_step_blocks = [x2d], [(Cx, n)]
    if has_pre:
        assert earlier_nchw is not None and H % 2 == 0 and W % 2 == 0
        wp, bp = _prep_1x1(params['pre'])
        c_pre, ce = wp.shape
        assert Cx + c_pre == w1.shape[1]
        # Nearest x2 upsample of the raw `earlier` input (exact commutation with the
        # pointwise pre 1x1 conv + BN + LeakyReLU) — replaces the O(HW^2) 0/1 matmul.
        e_full = jnp.repeat(jnp.repeat(earlier_nchw, 2, axis=2), 2, axis=3)
        e2d = jnp.transpose(e_full.reshape(B, ce, HW), (1, 0, 2)).reshape(ce, B * HW)
        per_step.append(e2d)
        per_step_blocks.append((ce, n))
        w1_pre, w1_x = w1[:, :c_pre], w1[:, c_pre:]     # host-side concat fold / split
        shared = [wp.astype(cd), bp, w1_pre.astype(cd), w1_x.astype(cd), b1,
                  w2.astype(cd), b2, w3.astype(cd), b3, w4.astype(cd), b4,
                  w5.astype(cd), b5, w6.astype(cd), b6]
    else:
        assert Cx == w1.shape[1]
        shared = [w1.astype(cd), b1, w2.astype(cd), b2, w3.astype(cd), b3,
                  w4.astype(cd), b4, w5.astype(cd), b5, w6.astype(cd), b6]

    in_specs = ([pl.BlockSpec(blk, lambda i: (0, i)) for blk in per_step_blocks]
                + [pl.BlockSpec(tuple(a.shape), lambda i: (0, 0)) for a in shared])

    kernel = functools.partial(
        _fused_anchors_kernel, has_pre=has_pre, H=H, W=W,
        compute_dtype=cd, roll_np=_pltpu_roll_is_np_convention())

    xp2d, x62d = pl.pallas_call(
        kernel,
        out_shape=(jax.ShapeDtypeStruct((c_half, B * HW), jnp.float32),
                   jax.ShapeDtypeStruct((c_out, B * HW), jnp.float32)),
        grid=(num_steps,),
        in_specs=in_specs,
        out_specs=(pl.BlockSpec((c_half, n), lambda i: (0, i)),
                   pl.BlockSpec((c_out, n), lambda i: (0, i))),
        compiler_params=pltpu.CompilerParams(
            dimension_semantics=("parallel",)),     # batch tiles split across TCs (v7x)
    )(*per_step, *shared)

    x_p = xp2d.reshape(c_half, B, H, W).transpose(1, 0, 2, 3)
    x6 = x62d.reshape(c_out, B, H, W).transpose(1, 0, 2, 3)
    return x_p, x6


# ---------------------------------------------------------------------------
# Pure-JAX reference (XLA conv) for correctness checking
# ---------------------------------------------------------------------------
def _ref_block(x, w, scale, bias):
    K = w.shape[0]
    pad = (K - 1) // 2
    y = jax.lax.conv_general_dilated(
        x, w, (1, 1), [(pad, pad), (pad, pad)],
        dimension_numbers=('NCHW', 'HWIO', 'NCHW'))
    y = y * scale.reshape(1, -1, 1, 1) + bias.reshape(1, -1, 1, 1)
    return jnp.where(y > 0, y, 0.1 * y)


def anchors_conv_reference(params, x, earlier=None):
    if 'pre' in params:
        e = _ref_block(earlier, **params['pre'])
        e = jnp.repeat(jnp.repeat(e, 2, axis=2), 2, axis=3)   # nearest x2
        x = jnp.concatenate([e, x], axis=1)                   # torch.cat(dim=1)
    x = _ref_block(x, **params['c1'])
    x = _ref_block(x, **params['c2'])
    x = _ref_block(x, **params['c3'])
    x = _ref_block(x, **params['c4'])
    x_p = _ref_block(x, **params['c5'])
    x = _ref_block(x_p, **params['c6'])
    return x_p, x


if __name__ == "__main__":
    key = jax.random.PRNGKey(0)
    k_par, k_x, k_e, k_par2, k_x2 = jax.random.split(key, 5)

    B, H, W = 2, 16, 16
    in_channels, out_channels = 12, 16

    # ---- with_pre=True: x has 2*in//3 channels, earlier is half resolution ----
    params = init_anchors_conv_params(k_par, in_channels, out_channels, pre=True)
    x = jax.random.normal(k_x, (B, 2 * in_channels // 3, H, W), jnp.float32)
    earlier = jax.random.normal(
        k_e, (B, 2 * in_channels // 3, H // 2, W // 2), jnp.float32)

    # exact f32 path vs XLA reference
    xp32, xo32 = anchors_conv_forward(params, x, earlier, compute_dtype=jnp.float32)
    jax.block_until_ready((xp32, xo32))
    rp, ro = anchors_conv_reference(params, x, earlier)
    assert xp32.shape == (B, out_channels // 2, H, W)
    assert xo32.shape == (B, out_channels, H, W)
    assert jnp.allclose(xp32, rp, atol=1e-4, rtol=1e-4)
    assert jnp.allclose(xo32, ro, atol=1e-4, rtol=1e-4)

    # default bf16 MXU-operand path (f32 accumulation / epilogue): loose tolerance
    # is intentional — operands are quantized to bf16 across a 7-conv chain.
    xpb, xob = anchors_conv_forward(params, x, earlier)
    jax.block_until_ready((xpb, xob))
    assert jnp.allclose(xpb, rp, atol=2e-1, rtol=1e-1)
    assert jnp.allclose(xob, ro, atol=2e-1, rtol=1e-1)

    # ---- with_pre=False path ----
    params2 = init_anchors_conv_params(k_par2, in_channels, out_channels, pre=False)
    x2 = jax.random.normal(k_x2, (B, in_channels, H, W), jnp.float32)
    yp32, yo32 = anchors_conv_forward(params2, x2, compute_dtype=jnp.float32)
    jax.block_until_ready((yp32, yo32))
    rp2, ro2 = anchors_conv_reference(params2, x2)
    assert jnp.allclose(yp32, rp2, atol=1e-4, rtol=1e-4)
    assert jnp.allclose(yo32, ro2, atol=1e-4, rtol=1e-4)
    ypb, yob = anchors_conv_forward(params2, x2)    # default bf16 path
    jax.block_until_ready((ypb, yob))
    assert jnp.allclose(ypb, rp2, atol=2e-1, rtol=1e-1)
    assert jnp.allclose(yob, ro2, atol=2e-1, rtol=1e-1)

    print("KERNEL_OK")
</pallas_src>

<mosaic_0001>
module attributes {stable_mosaic.version = 11 : i64} {
  func.func @k(%arg0: memref<8x128xf32, #tpu.memory_space<vmem>>, %arg1: memref<8x128xf32, #tpu.memory_space<vmem>>) attributes {dimension_semantics = [], scalar_prefetch = 0 : i64, scratch_operands = 0 : i64, tpu.core_type = #tpu.core_type<tc>} {
    %c0 = arith.constant 0 : index
    %c0_0 = arith.constant 0 : index
    %0 = vector.load %arg0[%c0, %c0_0] : memref<8x128xf32, #tpu.memory_space<vmem>>, vector<8x128xf32>
    %c1_i32 = arith.constant 1 : i32
    %1 = tpu.dynamic_rotate %0 by %c1_i32 dim 1 : vector<8x128xf32>, i32 -> vector<8x128xf32>
    %c0_1 = arith.constant 0 : index
    %c0_2 = arith.constant 0 : index
    %2 = vector.load %arg1[%c0_1, %c0_2] : memref<8x128xf32, #tpu.memory_space<vmem>>, vector<8x128xf32>
    tpu.vector_store %arg1[%c0_1, %c0_2], %1 {strides = array<i32>} : memref<8x128xf32, #tpu.memory_space<vmem>>, vector<8x128xf32>,
    return
  }
}

</mosaic_0001>

<llo_original>
// kernel: tpu_custom_call.1
$region0: #{tpu_custom_call.1}
  #allocation0 [shape = 'u32[]', space=smem, size = 0x4, offset = 0x4, fixed_abs, tag = 'smem constant byte address 0x4 - core index']
  #allocation1 [shape = 'u32[144,128]{1,0:T(1,128)}', space=vmem, size = 0x12000, scoped, tag = 'internal scratch']
  %s0 = inlined_call_operand.hbm [shape: f32[8,128], index: 0, kind: input, shape index: {}]
  %s1 = inlined_call_operand.hbm [shape: f32[8,128], index: 1, kind: output, shape index: {}]
  %s2 = sld [smem:[#allocation0]]
  $region18: #{tpu_custom_call.1} parent=0
    _
  %s4 = ssub.s32 1, %s2
  %s5 = scalar_select 0, %s4, %s2
  $region1: #{tpu_custom_call.1} parent=0
    #allocation2 [shape = 'u8[4096]{0}', space=vmem, size = 0x1000, scoped, tag = 'input window, operand 0, single buffered']
    #allocation3 [shape = 's32[1]{0}', space=sflag, size = 0x4, scoped, tag = 'scoped memory for tpu_custom_call.1']
    #allocation4 [shape = 's32[1]{0}', space=sflag, size = 0x4, scoped, tag = 'scoped memory for tpu_custom_call.1']
    #allocation5 [shape = 'u8[4096]{0}', space=vmem, size = 0x1000, scoped, tag = 'output window, operand 0, single buffered']
    %6 = vsyncpa [#allocation3], 0
    %7 = vsyncpa [#allocation4], 0
    // Predicated region
    $region2: #{tpu_custom_call.1} parent=1 // pred_check
      _
    $region3: #{tpu_custom_call.1} parent=1 // pred_check_branch
      %9 = sbr.rel (0) target = $region5
    $region4: #{tpu_custom_call.1} parent=1 // pred_region
      %s11 = ssub.s32 128, 128
      %12 = vsyncadd [#allocation3], %s11
      %s14 = sshll.u32 [#allocation2], 4
      %s15 = int_to_ptr.vmem [resolvable:$true] %s14
      %17 = dma.hbm_to_vmem [thread:$0]  %s0, 128, %s15, [#allocation3]
    $region5: #{tpu_custom_call.1} parent=1 // pred_fallthru
      _
    // Predicated region
    $region6: #{tpu_custom_call.1} parent=1 // pred_check
      _
    $region7: #{tpu_custom_call.1} parent=1 // pred_check_branch
      %19 = sbr.rel (0) target = $region9
    $region8: #{tpu_custom_call.1} parent=1 // pred_region
      %20 = dma.done [#allocation3], 128
    $region9: #{tpu_custom_call.1} parent=1 // pred_fallthru
      _
    %v21 = vld [vmem:[#allocation2] sm:$0xff]
    %22 = vrot.lane.b32.xlu0 %v21, 1
    %v23 = vpop.permute.xlu0 %22
    %24 = vst [vmem:[#allocation5] sm:$0xff] %v23
    // Predicated region
    $region10: #{tpu_custom_call.1} parent=1 // pred_check
      _
    $region11: #{tpu_custom_call.1} parent=1 // pred_check_branch
      %26 = sbr.rel (0) target = $region13
    $region12: #{tpu_custom_call.1} parent=1 // pred_region
      %s28 = ssub.s32 128, 128
      %29 = vsyncadd [#allocation4], %s28
      %s31 = sshll.u32 [#allocation5], 4
      %s32 = int_to_ptr.vmem [resolvable:$true] %s31
      %34 = dma.vmem_to_hbm [thread:$0]  %s32, 128, %s1, [#allocation4]
    $region13: #{tpu_custom_call.1} parent=1 // pred_fallthru
      _
    // Predicated region
    $region14: #{tpu_custom_call.1} parent=1 // pred_check
      _
    $region15: #{tpu_custom_call.1} parent=1 // pred_check_branch
      %36 = sbr.rel (0) target = $region17
    $region16: #{tpu_custom_call.1} parent=1 // pred_region
      %37 = dma.done [#allocation4], 128
    $region17: #{tpu_custom_call.1} parent=1 // pred_fallthru
      _
    %38 = vsyncpa [#allocation3], 1
    %39 = vsyncpa [#allocation4], 1

</llo_original>
